<compile_context>
chip_gen: v6e
topology: v6e:2x2x1
jax: 0.10.0
libtpu: 0.0.40
codegen_flags: <defaults>
</compile_context>

<pallas_src>
import functools

import jax
import jax.numpy as jnp
from jax import lax
from jax.experimental import pallas as pl
from jax.experimental.pallas import tpu as pltpu


def _conv_relu_kernel(x_ref, w_ref, b_ref, o_ref, xext_ref, col_ref,
                      *, ksize, cin, cout, width, hw, block_n):
    """One block of `block_n` images per grid step.

    x_ref:    (block_n, Cin, H*W)          bf16  lane-dense input block
    w_ref:    (Cout, K*K*Cin)              bf16  im2col-ordered weights
    b_ref:    (Cout, 1)                    f32   bias
    o_ref:    (block_n, Cout, H*W)         f32   lane-dense output block
    xext_ref: (Cin, H*W + 2*pad)           bf16  flat zero-haloed image (scratch)
    col_ref:  (K*K*Cin, block_n*H*W)       bf16  im2col matrix (scratch)
    """
    r = ksize // 2
    pad = r * width + r                       # flat halo size on each side

    # Hoisted left/right border masks: one per distinct nonzero dw, reused
    # across every dh (JAX does not CSE broadcast/iota chains).
    dw_mask = {}
    if r > 0:
        pj = lax.broadcasted_iota(jnp.int32, (cin, hw), 1) % width
        for dw in range(-r, r + 1):
            if dw != 0:
                dw_mask[dw] = jnp.logical_and(pj + dw >= 0, pj + dw < width)
    zero_tap = jnp.zeros((cin, hw), col_ref.dtype)

    # Zero only the tiny halo, once per step (the interior never touches it,
    # and re-zeroing each step keeps it correct under "parallel" scheduling).
    if pad > 0:
        halo = jnp.zeros((cin, pad), xext_ref.dtype)
        xext_ref[:, pl.ds(0, pad)] = halo
        xext_ref[:, pl.ds(pad + hw, pad)] = halo

    for img in range(block_n):
        # Straight copy: x is already (Cin, H*W) bf16 — no in-kernel reshape.
        xext_ref[:, pl.ds(pad, hw)] = x_ref[img]

        # im2col: every tap is a full-lane Cin-row slab written (unmasked) at
        # sublane offset t*Cin; only the lane-shifted *read* touches the XLU.
        for dh in range(-r, r + 1):
            for dw in range(-r, r + 1):
                t = (dh + r) * ksize + (dw + r)
                s = dh * width + dw
                tap = xext_ref[:, pl.ds(pad + s, hw)]          # (Cin, HW)
                if dw != 0:
                    tap = jnp.where(dw_mask[dw], tap, zero_tap)
                col_ref[pl.ds(t * cin, cin), pl.ds(img * hw, hw)] = tap

    # Single MXU matmul for the whole block, lane-dense output.
    y = jnp.dot(w_ref[...], col_ref[...],
                preferred_element_type=jnp.float32)            # (Cout, B*HW)
    y = jnp.maximum(y + b_ref[...], 0.0)                       # bias + ReLU

    for img in range(block_n):
        o_ref[img] = y[:, img * hw:(img + 1) * hw]


def _pick_block_n(n, hw, kkc, col_budget_bytes=8 << 20):
    """Largest divisor b of n keeping >= min(2, n) grid steps (so both v7x
    TensorCores get work) and the im2col scratch within a VMEM budget."""
    best = 1
    for b in range(1, n + 1):
        if n % b != 0:
            continue
        if (n // b) < min(2, n):
            continue
        if b * hw * kkc * 2 > col_budget_bytes:
            continue
        best = b
    return best


def cca_ksize_relu(x, weight, bias, *, ksize, block_n=None):
    """y = relu(conv2d_same(x, weight) + bias), PyTorch layout.

    x: (N, Cin, H, W) f32 NCHW; weight: (Cout, Cin, K, K) OIHW; bias: (Cout,).
    Returns (N, Cout, H, W) f32.
    """
    N, Cin, H, W = x.shape
    Cout = weight.shape[0]
    HW = H * W
    r = ksize // 2
    pad = r * W + r
    kkc = ksize * ksize * Cin

    if block_n is None:
        block_n = _pick_block_n(N, HW, kkc)
    assert N % block_n == 0

    # Wrapper-side layout plumbing (free / one-time):
    x_flat = x.reshape(N, Cin, HW).astype(jnp.bfloat16)        # lane-dense
    # OIHW -> O,H,W,I -> (Cout, K*K*Cin) so row index = (kh*K + kw)*Cin + c.
    w_t = jnp.transpose(weight, (0, 2, 3, 1)).reshape(Cout, kkc)
    w_t = w_t.astype(jnp.bfloat16)
    b2 = bias.reshape(Cout, 1).astype(jnp.float32)

    kernel = functools.partial(_conv_relu_kernel, ksize=ksize, cin=Cin,
                               cout=Cout, width=W, hw=HW, block_n=block_n)

    grid_spec = pltpu.PrefetchScalarGridSpec(
        num_scalar_prefetch=0,
        grid=(N // block_n,),
        in_specs=[
            pl.BlockSpec((block_n, Cin, HW), lambda n: (n, 0, 0)),
            pl.BlockSpec((Cout, kkc), lambda n: (0, 0)),
            pl.BlockSpec((Cout, 1), lambda n: (0, 0)),
        ],
        out_specs=pl.BlockSpec((block_n, Cout, HW), lambda n: (n, 0, 0)),
        scratch_shapes=[
            pltpu.VMEM((Cin, HW + 2 * pad), jnp.bfloat16),      # haloed image
            pltpu.VMEM((kkc, block_n * HW), jnp.bfloat16),      # im2col matrix
        ],
    )

    # Explicit VMEM budget (scratch + double-buffered I/O blocks + weights),
    # generously padded but capped at v7x's 64 MiB physical VMEM.
    xext_bytes = Cin * (HW + 2 * pad) * 2
    col_bytes = kkc * block_n * HW * 2
    io_bytes = 2 * block_n * HW * (Cin * 2 + Cout * 4)
    w_bytes = 2 * (Cout * kkc * 2 + Cout * 4)
    vmem_limit = int(min(64 << 20,
                         max(32 << 20,
                             2 * (xext_bytes + col_bytes + io_bytes + w_bytes))))

    out = pl.pallas_call(
        kernel,
        out_shape=jax.ShapeDtypeStruct((N, Cout, HW), jnp.float32),
        grid_spec=grid_spec,
        compiler_params=pltpu.CompilerParams(
            dimension_semantics=("parallel",),
            vmem_limit_bytes=vmem_limit),
    )(x_flat, w_t, b2)
    return out.reshape(N, Cout, H, W)


def ref_forward(x, weight, bias, *, ksize):
    """Pure-JAX f32 reference mirroring the PyTorch module (NCHW/OIHW)."""
    p = ksize // 2
    y = lax.conv_general_dilated(
        x, weight, (1, 1), [(p, p), (p, p)],
        dimension_numbers=('NCHW', 'OIHW', 'NCHW'),
        precision=lax.Precision.HIGHEST)
    y = y + bias.reshape(1, -1, 1, 1)
    return jnp.maximum(y, 0.0)


if __name__ == "__main__":
    # PyTorch NCHW (2, 32, 16, 16); kernel_size = 3.
    N, Cin, Cout, H, W, K = 2, 32, 32, 16, 16, 3
    key = jax.random.PRNGKey(0)
    kx, kw, kb = jax.random.split(key, 3)
    x = jax.random.normal(kx, (N, Cin, H, W), jnp.float32)
    weight = 0.1 * jax.random.normal(kw, (Cout, Cin, K, K), jnp.float32)
    bias = 0.1 * jax.random.normal(kb, (Cout,), jnp.float32)

    out = jax.block_until_ready(cca_ksize_relu(x, weight, bias, ksize=K))
    ref = jax.block_until_ready(ref_forward(x, weight, bias, ksize=K))

    assert out.shape == ref.shape == (N, Cout, H, W)
    max_err = float(jnp.max(jnp.abs(out - ref)))
    # bf16 MXU operands (f32 accumulation) vs f32 reference -> bf16 tolerance.
    assert jnp.allclose(out, ref, rtol=3e-2, atol=3e-2), max_err
    print("KERNEL_OK")
</pallas_src>

<mosaic_0001>
module attributes {stable_mosaic.version = 11 : i64} {
  func.func @_conv_relu_kernel(%arg0: i32, %arg1: memref<1x32x256xbf16, #tpu.memory_space<vmem>>, %arg2: memref<32x288xbf16, #tpu.memory_space<vmem>>, %arg3: memref<32x1xf32, #tpu.memory_space<vmem>>, %arg4: memref<1x32x256xf32, #tpu.memory_space<vmem>>, %arg5: memref<32x290xbf16, #tpu.memory_space<vmem>>, %arg6: memref<288x256xbf16, #tpu.memory_space<vmem>>) attributes {dimension_semantics = [#tpu.dimension_semantics<parallel>], iteration_bounds = array<i64: 2>, scalar_prefetch = 0 : i64, scratch_operands = 2 : i64, tpu.core_type = #tpu.core_type<tc>, window_params = [{transform_indices = @transform_0, window_bounds = array<i64: 1, 32, 256>}, {pipeline_mode = #tpu.pipeline_mode<synchronous>, transform_indices = @transform_1, window_bounds = array<i64: 32, 288>}, {pipeline_mode = #tpu.pipeline_mode<synchronous>, transform_indices = @transform_2, window_bounds = array<i64: 32, 1>}, {transform_indices = @transform_3, window_bounds = array<i64: 1, 32, 256>}]} {
    %0 = tpu.iota {dimensions = array<i32: 1>} : vector<32x256xi32>
    %c16_i32 = arith.constant 16 : i32
    %c0_i32 = arith.constant 0 : i32
    %1 = arith.cmpi eq, %c16_i32, %c0_i32 : i32
    %c1_i32 = arith.constant 1 : i32
    %2 = arith.select %1, %c1_i32, %c16_i32 : i32
    %3 = vector.broadcast %2 : i32 to vector<32x256xi32>
    %4 = arith.remsi %0, %3 : vector<32x256xi32>
    %c0_i32_0 = arith.constant 0 : i32
    %5 = vector.broadcast %c0_i32_0 : i32 to vector<32x256xi32>
    %6 = arith.cmpi ne, %4, %5 : vector<32x256xi32>
    %c0_i32_1 = arith.constant 0 : i32
    %7 = vector.broadcast %c0_i32_1 : i32 to vector<32x256xi32>
    %8 = arith.cmpi slt, %4, %7 : vector<32x256xi32>
    %c0_i32_2 = arith.constant 0 : i32
    %9 = arith.cmpi slt, %2, %c0_i32_2 : i32
    %10 = vector.broadcast %9 : i1 to vector<32x256xi1>
    %11 = vector.broadcast %10 : vector<32x256xi1> to vector<32x256xi1>
    %12 = arith.xori %8, %11 : vector<32x256xi1>
    %13 = arith.andi %12, %6 : vector<32x256xi1>
    %14 = vector.broadcast %2 : i32 to vector<32x256xi32>
    %15 = arith.addi %4, %14 : vector<32x256xi32>
    %16 = arith.select %13, %15, %4 : vector<32x256xi1>, vector<32x256xi32>
    %c-1_i32 = arith.constant -1 : i32
    %17 = vector.broadcast %c-1_i32 : i32 to vector<32x256xi32>
    %18 = arith.addi %16, %17 : vector<32x256xi32>
    %c0_i32_3 = arith.constant 0 : i32
    %19 = vector.broadcast %c0_i32_3 : i32 to vector<32x256xi32>
    %20 = arith.cmpi sge, %18, %19 : vector<32x256xi32>
    %c-1_i32_4 = arith.constant -1 : i32
    %21 = vector.broadcast %c-1_i32_4 : i32 to vector<32x256xi32>
    %22 = arith.addi %16, %21 : vector<32x256xi32>
    %c16_i32_5 = arith.constant 16 : i32
    %23 = vector.broadcast %c16_i32_5 : i32 to vector<32x256xi32>
    %24 = arith.cmpi slt, %22, %23 : vector<32x256xi32>
    %25 = arith.andi %20, %24 : vector<32x256xi1>
    %c1_i32_6 = arith.constant 1 : i32
    %26 = vector.broadcast %c1_i32_6 : i32 to vector<32x256xi32>
    %27 = arith.addi %16, %26 : vector<32x256xi32>
    %c0_i32_7 = arith.constant 0 : i32
    %28 = vector.broadcast %c0_i32_7 : i32 to vector<32x256xi32>
    %29 = arith.cmpi sge, %27, %28 : vector<32x256xi32>
    %c1_i32_8 = arith.constant 1 : i32
    %30 = vector.broadcast %c1_i32_8 : i32 to vector<32x256xi32>
    %31 = arith.addi %16, %30 : vector<32x256xi32>
    %c16_i32_9 = arith.constant 16 : i32
    %32 = vector.broadcast %c16_i32_9 : i32 to vector<32x256xi32>
    %33 = arith.cmpi slt, %31, %32 : vector<32x256xi32>
    %34 = arith.andi %29, %33 : vector<32x256xi1>
    %cst = arith.constant 0.000000e+00 : bf16
    %35 = vector.broadcast %cst : bf16 to vector<32x256xbf16>
    %cst_10 = arith.constant 0.000000e+00 : bf16
    %36 = vector.broadcast %cst_10 : bf16 to vector<32x17xbf16>
    %c0 = arith.constant 0 : index
    %c0_11 = arith.constant 0 : index
    %37 = vector.load %arg5[%c0, %c0_11] : memref<32x290xbf16, #tpu.memory_space<vmem>>, vector<32x17xbf16>
    tpu.vector_store %arg5[%c0, %c0_11], %36 {strides = array<i32>} : memref<32x290xbf16, #tpu.memory_space<vmem>>, vector<32x17xbf16>,
    %c0_12 = arith.constant 0 : index
    %c273 = arith.constant 273 : index
    %38 = vector.load %arg5[%c0_12, %c273] : memref<32x290xbf16, #tpu.memory_space<vmem>>, vector<32x17xbf16>
    tpu.vector_store %arg5[%c0_12, %c273], %36 {strides = array<i32>} : memref<32x290xbf16, #tpu.memory_space<vmem>>, vector<32x17xbf16>,
    %c0_13 = arith.constant 0 : index
    %c0_14 = arith.constant 0 : index
    %c0_15 = arith.constant 0 : index
    %39 = vector.load %arg1[%c0_13, %c0_14, %c0_15] : memref<1x32x256xbf16, #tpu.memory_space<vmem>>, vector<1x32x256xbf16>
    %40 = vector.shape_cast %39 : vector<1x32x256xbf16> to vector<32x256xbf16>
    %c0_16 = arith.constant 0 : index
    %c17 = arith.constant 17 : index
    %41 = vector.load %arg5[%c0_16, %c17] : memref<32x290xbf16, #tpu.memory_space<vmem>>, vector<32x256xbf16>
    tpu.vector_store %arg5[%c0_16, %c17], %40 {strides = array<i32>} : memref<32x290xbf16, #tpu.memory_space<vmem>>, vector<32x256xbf16>,
    %c0_17 = arith.constant 0 : index
    %c0_18 = arith.constant 0 : index
    %42 = vector.load %arg5[%c0_17, %c0_18] : memref<32x290xbf16, #tpu.memory_space<vmem>>, vector<32x256xbf16>
    %43 = arith.select %25, %42, %35 : vector<32x256xi1>, vector<32x256xbf16>
    %c0_19 = arith.constant 0 : index
    %c0_20 = arith.constant 0 : index
    %44 = vector.load %arg6[%c0_19, %c0_20] : memref<288x256xbf16, #tpu.memory_space<vmem>>, vector<32x256xbf16>
    tpu.vector_store %arg6[%c0_19, %c0_20], %43 {strides = array<i32>} : memref<288x256xbf16, #tpu.memory_space<vmem>>, vector<32x256xbf16>,
    %c0_21 = arith.constant 0 : index
    %c1 = arith.constant 1 : index
    %45 = vector.load %arg5[%c0_21, %c1] : memref<32x290xbf16, #tpu.memory_space<vmem>>, vector<32x256xbf16>
    %c32 = arith.constant 32 : index
    %c0_22 = arith.constant 0 : index
    %46 = vector.load %arg6[%c32, %c0_22] : memref<288x256xbf16, #tpu.memory_space<vmem>>, vector<32x256xbf16>
    tpu.vector_store %arg6[%c32, %c0_22], %45 {strides = array<i32>} : memref<288x256xbf16, #tpu.memory_space<vmem>>, vector<32x256xbf16>,
    %c0_23 = arith.constant 0 : index
    %c2 = arith.constant 2 : index
    %47 = vector.load %arg5[%c0_23, %c2] : memref<32x290xbf16, #tpu.memory_space<vmem>>, vector<32x256xbf16>
    %48 = arith.select %34, %47, %35 : vector<32x256xi1>, vector<32x256xbf16>
    %c64 = arith.constant 64 : index
    %c0_24 = arith.constant 0 : index
    %49 = vector.load %arg6[%c64, %c0_24] : memref<288x256xbf16, #tpu.memory_space<vmem>>, vector<32x256xbf16>
    tpu.vector_store %arg6[%c64, %c0_24], %48 {strides = array<i32>} : memref<288x256xbf16, #tpu.memory_space<vmem>>, vector<32x256xbf16>,
    %c0_25 = arith.constant 0 : index
    %c16 = arith.constant 16 : index
    %50 = vector.load %arg5[%c0_25, %c16] : memref<32x290xbf16, #tpu.memory_space<vmem>>, vector<32x256xbf16>
    %51 = arith.select %25, %50, %35 : vector<32x256xi1>, vector<32x256xbf16>
    %c96 = arith.constant 96 : index
    %c0_26 = arith.constant 0 : index
    %52 = vector.load %arg6[%c96, %c0_26] : memref<288x256xbf16, #tpu.memory_space<vmem>>, vector<32x256xbf16>
    tpu.vector_store %arg6[%c96, %c0_26], %51 {strides = array<i32>} : memref<288x256xbf16, #tpu.memory_space<vmem>>, vector<32x256xbf16>,
    %c0_27 = arith.constant 0 : index
    %c17_28 = arith.constant 17 : index
    %53 = vector.load %arg5[%c0_27, %c17_28] : memref<32x290xbf16, #tpu.memory_space<vmem>>, vector<32x256xbf16>
    %c128 = arith.constant 128 : index
    %c0_29 = arith.constant 0 : index
    %54 = vector.load %arg6[%c128, %c0_29] : memref<288x256xbf16, #tpu.memory_space<vmem>>, vector<32x256xbf16>
    tpu.vector_store %arg6[%c128, %c0_29], %53 {strides = array<i32>} : memref<288x256xbf16, #tpu.memory_space<vmem>>, vector<32x256xbf16>,
    %c0_30 = arith.constant 0 : index
    %c18 = arith.constant 18 : index
    %55 = vector.load %arg5[%c0_30, %c18] : memref<32x290xbf16, #tpu.memory_space<vmem>>, vector<32x256xbf16>
    %56 = arith.select %34, %55, %35 : vector<32x256xi1>, vector<32x256xbf16>
    %c160 = arith.constant 160 : index
    %c0_31 = arith.constant 0 : index
    %57 = vector.load %arg6[%c160, %c0_31] : memref<288x256xbf16, #tpu.memory_space<vmem>>, vector<32x256xbf16>
    tpu.vector_store %arg6[%c160, %c0_31], %56 {strides = array<i32>} : memref<288x256xbf16, #tpu.memory_space<vmem>>, vector<32x256xbf16>,
    %c0_32 = arith.constant 0 : index
    %c32_33 = arith.constant 32 : index
    %58 = vector.load %arg5[%c0_32, %c32_33] : memref<32x290xbf16, #tpu.memory_space<vmem>>, vector<32x256xbf16>
    %59 = arith.select %25, %58, %35 : vector<32x256xi1>, vector<32x256xbf16>
    %c192 = arith.constant 192 : index
    %c0_34 = arith.constant 0 : index
    %60 = vector.load %arg6[%c192, %c0_34] : memref<288x256xbf16, #tpu.memory_space<vmem>>, vector<32x256xbf16>
    tpu.vector_store %arg6[%c192, %c0_34], %59 {strides = array<i32>} : memref<288x256xbf16, #tpu.memory_space<vmem>>, vector<32x256xbf16>,
    %c0_35 = arith.constant 0 : index
    %c33 = arith.constant 33 : index
    %61 = vector.load %arg5[%c0_35, %c33] : memref<32x290xbf16, #tpu.memory_space<vmem>>, vector<32x256xbf16>
    %c224 = arith.constant 224 : index
    %c0_36 = arith.constant 0 : index
    %62 = vector.load %arg6[%c224, %c0_36] : memref<288x256xbf16, #tpu.memory_space<vmem>>, vector<32x256xbf16>
    tpu.vector_store %arg6[%c224, %c0_36], %61 {strides = array<i32>} : memref<288x256xbf16, #tpu.memory_space<vmem>>, vector<32x256xbf16>,
    %c0_37 = arith.constant 0 : index
    %c34 = arith.constant 34 : index
    %63 = vector.load %arg5[%c0_37, %c34] : memref<32x290xbf16, #tpu.memory_space<vmem>>, vector<32x256xbf16>
    %64 = arith.select %34, %63, %35 : vector<32x256xi1>, vector<32x256xbf16>
    %c256 = arith.constant 256 : index
    %c0_38 = arith.constant 0 : index
    %65 = vector.load %arg6[%c256, %c0_38] : memref<288x256xbf16, #tpu.memory_space<vmem>>, vector<32x256xbf16>
    tpu.vector_store %arg6[%c256, %c0_38], %64 {strides = array<i32>} : memref<288x256xbf16, #tpu.memory_space<vmem>>, vector<32x256xbf16>,
    %c0_39 = arith.constant 0 : index
    %c0_40 = arith.constant 0 : index
    %66 = vector.load %arg2[%c0_39, %c0_40] : memref<32x288xbf16, #tpu.memory_space<vmem>>, vector<32x288xbf16>
    %c0_41 = arith.constant 0 : index
    %c0_42 = arith.constant 0 : index
    %67 = vector.load %arg6[%c0_41, %c0_42] : memref<288x256xbf16, #tpu.memory_space<vmem>>, vector<288x256xbf16>
    %cst_43 = arith.constant dense<0.000000e+00> : vector<32x256xf32>
    %68 = tpu.matmul %66, %67, %cst_43 {dimension_numbers = #tpu.dot_dimension_numbers<[1], [0], [0], [1], [0, 0, 1, 1], [], []>} : vector<32x288xbf16>, vector<288x256xbf16>, vector<32x256xf32> -> vector<32x256xf32>
    %c0_44 = arith.constant 0 : index
    %c0_45 = arith.constant 0 : index
    %69 = vector.load %arg3[%c0_44, %c0_45] : memref<32x1xf32, #tpu.memory_space<vmem>>, vector<32x1xf32>
    %70 = vector.broadcast %69 : vector<32x1xf32> to vector<32x256xf32>
    %71 = arith.addf %68, %70 : vector<32x256xf32>
    %cst_46 = arith.constant 0.000000e+00 : f32
    %72 = vector.broadcast %cst_46 : f32 to vector<32x256xf32>
    %73 = arith.maximumf %71, %72 : vector<32x256xf32>
    %c0_47 = arith.constant 0 : index
    %c0_48 = arith.constant 0 : index
    %c0_49 = arith.constant 0 : index
    %74 = vector.load %arg4[%c0_47, %c0_48, %c0_49] : memref<1x32x256xf32, #tpu.memory_space<vmem>>, vector<1x32x256xf32>
    %75 = vector.shape_cast %74 : vector<1x32x256xf32> to vector<32x256xf32>
    %76 = vector.shape_cast %73 : vector<32x256xf32> to vector<1x32x256xf32>
    tpu.vector_store %arg4[%c0_47, %c0_48, %c0_49], %76 {strides = array<i32>} : memref<1x32x256xf32, #tpu.memory_space<vmem>>, vector<1x32x256xf32>,
    return
  }
  func.func @transform_0(%arg0: i32) -> (i32, i32, i32) {
    %c0_i32 = arith.constant 0 : i32
    %c0_i32_0 = arith.constant 0 : i32
    %c0_i32_1 = arith.constant 0 : i32
    return %arg0, %c0_i32, %c0_i32_0 : i32, i32, i32
  }
  func.func @transform_1(%arg0: i32) -> (i32, i32) {
    %c0_i32 = arith.constant 0 : i32
    %c0_i32_0 = arith.constant 0 : i32
    %c0_i32_1 = arith.constant 0 : i32
    return %c0_i32, %c0_i32_0 : i32, i32
  }
  func.func @transform_2(%arg0: i32) -> (i32, i32) {
    %c0_i32 = arith.constant 0 : i32
    %c0_i32_0 = arith.constant 0 : i32
    %c0_i32_1 = arith.constant 0 : i32
    return %c0_i32, %c0_i32_0 : i32, i32
  }
  func.func @transform_3(%arg0: i32) -> (i32, i32, i32) {
    %c0_i32 = arith.constant 0 : i32
    %c0_i32_0 = arith.constant 0 : i32
    %c0_i32_1 = arith.constant 0 : i32
    return %arg0, %c0_i32, %c0_i32_0 : i32, i32, i32
  }
}

</mosaic_0001>

<llo_original>
// kernel: tpu_custom_call.1
$region0: #{tpu_custom_call.1}
  #allocation0 [shape = 'u32[]', space=smem, size = 0x4, offset = 0x4, fixed_abs, tag = 'smem constant byte address 0x4 - core index']
  #allocation1 [shape = 'u32[144,128]{1,0:T(1,128)}', space=vmem, size = 0x12000, scoped, tag = 'internal scratch']
  #allocation2 [shape = 'bf16[32,290]{1,0:T(8,128)(2,1)}', space=vmem, size = 0x6000, scoped, tag = 'scratch operand']
  #allocation3 [shape = 'bf16[288,256]{1,0:T(8,128)(2,1)}', space=vmem, size = 0x24000, scoped, tag = 'scratch operand']
  %s0 = inlined_call_operand.hbm [shape: bf16[2,32,256], index: 0, kind: input, shape index: {}]
  %s1 = inlined_call_operand.hbm [shape: bf16[32,288], index: 1, kind: input, shape index: {}]
  %s2 = inlined_call_operand.vmem [shape: f32[32,1], index: 2, kind: input, shape index: {}]
  %s3 = inlined_call_operand.hbm [shape: f32[2,32,256], index: 3, kind: output, shape index: {}]
  %s4 = sld [smem:[#allocation0]]
  $region53: #{tpu_custom_call.1} parent=0
    _
  %s6 = ssub.s32 1, %s4
  %s7 = scalar_select 0, %s6, %s4
  $region1: #{tpu_custom_call.1} parent=0
    #allocation4 [shape = 'u8[32768]{0}', space=vmem, size = 0x8000, scoped, tag = 'input window, operand 0']
    #allocation5 [shape = 's32[2]{0}', space=sflag, size = 0x8, scoped, tag = 'scoped memory for tpu_custom_call.1']
    #allocation6 [shape = 's32[2]{0}', space=sflag, size = 0x8, scoped, tag = 'scoped memory for tpu_custom_call.1']
    #allocation7 [shape = 'u8[24576]{0}', space=vmem, size = 0x6000, scoped, tag = 'input window, operand 1, single buffered']
    #allocation8 [shape = 's32[1]{0}', space=sflag, size = 0x4, scoped, tag = 'scoped memory for tpu_custom_call.1']
    #allocation9 [shape = 'u8[65536]{0}', space=vmem, size = 0x10000, scoped, tag = 'output window, operand 0']
    %8 = vsyncpa [#allocation5], 0
    %s9 = scalar_lea.sflag [#allocation5], 1
    %10 = vsyncpa %s9, 0
    %11 = vsyncpa [#allocation8], 0
    %12 = vsyncpa [#allocation6], 0
    %s13 = scalar_lea.sflag [#allocation6], 1
    %14 = vsyncpa %s13, 0
    loop: start=0, step=1, limit=4
    $region2: #{tpu_custom_call.1} parent=1 // loop_pre_header
      _
    $region3: #{tpu_custom_call.1} parent=1 // loop_header
      %s16 = sphi 0, %s20
      %p17 = scmp.ge.s32.totalorder %s16, 4
      %s26 = sphi 0, %s28
      %s29 = sphi 0, %s26
      %s30 = sphi 0, %s29
      %s46 = sphi 0, %s30
      %s50 = sphi 0, %s50
      %s52 = sphi 0, %s50
      %s53 = sphi 0, %s52
      %s67 = sphi 0, %s53
      %s71 = sphi 0, %s71
      %s73 = sphi 0, %s71
      %s74 = sphi 0, %s73
      %s88 = sphi 0, %s74
      %s94 = sphi 0, %s96
      %s97 = sphi 0, %s94
      %s98 = sphi 0, %s97
      %s114 = sphi 0, %s98
    $region4: #{tpu_custom_call.1} parent=1 // loop_header_branch
      %19 = sbr.rel (%p17) target = $region8
    $region5: #{tpu_custom_call.1} parent=1 // loop_body
      %s21 = ssub.s32 %s16, 1
      %s22 = ssub.s32 %s16, 2
      %s23 = sadd.s32 %s16, 1
      %s24 = ssub.s32 %s16, %s23
      %p25 = scmp.eq.s32.totalorder %s24, 0
      %s27 = sadd.s32 %s26, 1
      %s28 = scalar_select %p25, %s26, %s27
      %p31 = pneg %p25
      %p32 = scmp.eq.s32.totalorder %s16, 1
      %p33 = por %p31, %p32
      %p34 = scmp.ne.s32.totalorder %s26, %s29
      %p35 = scmp.eq.s32.totalorder %s16, 0
      %p36 = por %p34, %p35
      %p37 = scmp.ne.s32.totalorder %s26, %s29
      %p38 = scmp.eq.s32.totalorder %s21, 1
      %p39 = por %p37, %p38
      %p40 = scmp.ne.s32.totalorder %s29, %s30
      %p41 = scmp.eq.s32.totalorder %s21, 0
      %p42 = por %p40, %p41
      %p43 = scmp.ne.s32.totalorder %s29, %s30
      %p44 = scmp.eq.s32.totalorder %s22, 1
      %p45 = por %p43, %p44
      %p47 = scmp.ne.s32.totalorder %s30, %s46
      %p48 = scmp.eq.s32.totalorder %s22, 0
      %p49 = por %p47, %p48
      %s51 = sadd.s32 %s50, 1
      %p54 = scmp.eq.s32.totalorder %s16, 1
      %p55 = scmp.ne.s32.totalorder %s50, %s52
      %p56 = scmp.eq.s32.totalorder %s16, 0
      %p57 = por %p55, %p56
      %p58 = scmp.ne.s32.totalorder %s50, %s52
      %p59 = scmp.eq.s32.totalorder %s21, 1
      %p60 = por %p58, %p59
      %p61 = scmp.ne.s32.totalorder %s52, %s53
      %p62 = scmp.eq.s32.totalorder %s21, 0
      %p63 = por %p61, %p62
      %p64 = scmp.ne.s32.totalorder %s52, %s53
      %p65 = scmp.eq.s32.totalorder %s22, 1
      %p66 = por %p64, %p65
      %p68 = scmp.ne.s32.totalorder %s53, %s67
      %p69 = scmp.eq.s32.totalorder %s22, 0
      %p70 = por %p68, %p69
      %s72 = sadd.s32 %s71, 1
      %p75 = scmp.eq.s32.totalorder %s16, 1
      %p76 = scmp.ne.s32.totalorder %s71, %s73
      %p77 = scmp.eq.s32.totalorder %s16, 0
      %p78 = por %p76, %p77
      %p79 = scmp.ne.s32.totalorder %s71, %s73
      %p80 = scmp.eq.s32.totalorder %s21, 1
      %p81 = por %p79, %p80
      %p82 = scmp.ne.s32.totalorder %s73, %s74
      %p83 = scmp.eq.s32.totalorder %s21, 0
      %p84 = por %p82, %p83
      %p85 = scmp.ne.s32.totalorder %s73, %s74
      %p86 = scmp.eq.s32.totalorder %s22, 1
      %p87 = por %p85, %p86
      %p89 = scmp.ne.s32.totalorder %s74, %s88
      %p90 = scmp.eq.s32.totalorder %s22, 0
      %p91 = por %p89, %p90
      %s92 = ssub.s32 %s16, %s23
      %p93 = scmp.eq.s32.totalorder %s92, 0
      %s95 = sadd.s32 %s94, 1
      %s96 = scalar_select %p93, %s94, %s95
      %p99 = pneg %p93
      %p100 = scmp.eq.s32.totalorder %s16, 1
      %p101 = por %p99, %p100
      %p102 = scmp.ne.s32.totalorder %s94, %s97
      %p103 = scmp.eq.s32.totalorder %s16, 0
      %p104 = por %p102, %p103
      %p105 = scmp.ne.s32.totalorder %s94, %s97
      %p106 = scmp.eq.s32.totalorder %s21, 1
      %p107 = por %p105, %p106
      %p108 = scmp.ne.s32.totalorder %s97, %s98
      %p109 = scmp.eq.s32.totalorder %s21, 0
      %p110 = por %p108, %p109
      %p111 = scmp.ne.s32.totalorder %s97, %s98
      %p112 = scmp.eq.s32.totalorder %s22, 1
      %p113 = por %p111, %p112
      %p115 = scmp.ne.s32.totalorder %s98, %s114
      %p116 = scmp.eq.s32.totalorder %s22, 0
      %p117 = por %p115, %p116
      %p118 = scmp.le.s32.totalorder 1, %s16
      %p119 = scmp.lt.s32.totalorder %s16, 3
      %p120 = pnand %p118, %p119
      %p121 = pneg %p120
      // Predicated region
      $region9: #{tpu_custom_call.1} parent=5 // pred_check
        _
      $region10: #{tpu_custom_call.1} parent=5 // pred_check_branch
        %123 = sbr.rel (%p120) target = $region12
      $region11: #{tpu_custom_call.1} parent=5 // pred_region
        %s124 = ssub.s32 %s16, 1
        // Predicated region
        $region13: #{tpu_custom_call.1} parent=11 // pred_check
          %p125 = pneg %p63
        $region14: #{tpu_custom_call.1} parent=11 // pred_check_branch
          %127 = sbr.rel (%p125) target = $region16
        $region15: #{tpu_custom_call.1} parent=11 // pred_region
          %s129 = ssub.s32 768, 768
          %130 = vsyncadd [#allocation8], %s129
          %s131 = sshll.u32 [#allocation7], 4
          %s132 = int_to_ptr.vmem [resolvable:$true] %s131
          %137 = dma.hbm_to_vmem [thread:$0]  %s1, 768, %s132, [#allocation8], 192, 192, 12
        $region16: #{tpu_custom_call.1} parent=11 // pred_fallthru
          _
        // Predicated region
        $region17: #{tpu_custom_call.1} parent=11 // pred_check
          %p138 = pneg %p84
        $region18: #{tpu_custom_call.1} parent=11 // pred_check_branch
          %140 = sbr.rel (%p138) target = $region20
        $region19: #{tpu_custom_call.1} parent=11 // pred_region
          _
        $region20: #{tpu_custom_call.1} parent=11 // pred_fallthru
          _
      $region12: #{tpu_custom_call.1} parent=5 // pred_fallthru
        _
      %p141 = scmp.lt.s32.totalorder %s16, 2
      // Predicated region
      $region21: #{tpu_custom_call.1} parent=5 // pred_check
        %p142 = pneg %p141
      $region22: #{tpu_custom_call.1} parent=5 // pred_check_branch
        %144 = sbr.rel (%p142) target = $region24
      $region23: #{tpu_custom_call.1} parent=5 // pred_region
        // Predicated region
        $region25: #{tpu_custom_call.1} parent=23 // pred_check
          %p145 = pneg %p36
        $region26: #{tpu_custom_call.1} parent=23 // pred_check_branch
          %147 = sbr.rel (%p145) target = $region28
        $region27: #{tpu_custom_call.1} parent=23 // pred_region
          %s148 = sand.u32 %s26, 1
          %s149 = scalar_lea.sflag [#allocation5], %s148
          %s150 = sand.u32 %s26, 1
          %s151 = smul.addr %s150, 32
          %s152 = scalar_lea.vmem [#allocation4], %s151
          %s154 = ssub.s32 512, 512
          %155 = vsyncadd %s149, %s154
          %s156 = smul.addr %s16, 8
          %s157 = smul.addr %s156, 64
          %s158 = scalar_lea.hbm %s0, %s157
          %s159 = sshll.u32 %s152, 4
          %s160 = int_to_ptr.vmem [resolvable:$true] %s159
          %165 = dma.hbm_to_vmem [thread:$0]  %s158, 512, %s160, %s149, 128, 128, 8
        $region28: #{tpu_custom_call.1} parent=23 // pred_fallthru
          _
      $region24: #{tpu_custom_call.1} parent=5 // pred_fallthru
        _
      %p166 = scmp.le.s32.totalorder 1, %s16
      %p167 = scmp.lt.s32.totalorder %s16, 3
      %p168 = pnand %p166, %p167
      %p169 = pneg %p168
      // Predicated region
      $region29: #{tpu_custom_call.1} parent=5 // pred_check
        _
      $region30: #{tpu_custom_call.1} parent=5 // pred_check_branch
        %171 = sbr.rel (%p168) target = $region32
      $region31: #{tpu_custom_call.1} parent=5 // pred_region
        %s172 = ssub.s32 %s16, 1
        %s173 = sand.u32 %s29, 1
        %s174 = scalar_lea.sflag [#allocation5], %s173
        %s175 = sand.u32 %s29, 1
        %s176 = smul.addr %s175, 32
        %s177 = scalar_lea.vmem [#allocation4], %s176
        // Predicated region
        $region33: #{tpu_custom_call.1} parent=31 // pred_check
          %p178 = pneg %p42
        $region34: #{tpu_custom_call.1} parent=31 // pred_check_branch
          %180 = sbr.rel (%p178) target = $region36
        $region35: #{tpu_custom_call.1} parent=31 // pred_region
          %181 = dma.done %s174, 512
        $region36: #{tpu_custom_call.1} parent=31 // pred_fallthru
          _
        // Predicated region
        $region37: #{tpu_custom_call.1} parent=31 // pred_check
          %p182 = pneg %p63
        $region38: #{tpu_custom_call.1} parent=31 // pred_check_branch
          %184 = sbr.rel (%p182) target = $region40
        $region39: #{tpu_custom_call.1} parent=31 // pred_region
          %185 = dma.done [#allocation8], 768
        $region40: #{tpu_custom_call.1} parent=31 // pred_fallthru
          _
        %s186 = sand.u32 %s29, 1
        %s187 = scalar_lea.sflag [#allocation5], %s186
        %s188 = sand.u32 %s29, 1
        %s189 = smul.addr %s188, 32
        %s190 = scalar_lea.vmem [#allocation4], %s189
        %p191 = pneg %p42
        %p192 = pneg %p39
        %p193 = pneg %p63
        %p194 = pneg %p60
        %p195 = pneg %p84
        %p196 = pneg %p81
        %p197 = pneg %p110
        %p198 = pneg %p107
        %s199 = sand.u32 %s97, 1
        %s200 = scalar_lea.sflag [#allocation6], %s199
        %s201 = sand.u32 %s97, 1
        %s202 = smul.addr %s201, 64
        %s203 = scalar_lea.vmem [#allocation9], %s202
        %v207 = vlaneseq
        %v208 = vand.u32 %v207, 127
        %v209 = vadd.s32 %v208, 128
        %vm210 = vcmp.lt.s32.totalorder %v208, 0
        %v211 = vsub.s32 0, %v208
        %v212 = vsel %vm210, %v211, %v208
        %v213 = vshrl.u32 %v212, 4
        %v214 = vand.u32 %v212, 15
        %v215 = vsub.s32 0, %v214
        %v216 = vsel %vm210, %v215, %v214
        %vm217 = vcmp.lt.s32.totalorder %v209, 0
        %v218 = vsub.s32 0, %v209
        %v219 = vsel %vm217, %v218, %v209
        %v220 = vshrl.u32 %v219, 4
        %v221 = vand.u32 %v219, 15
        %v222 = vsub.s32 0, %v221
        %v223 = vsel %vm217, %v222, %v221
        %vm224 = vcmp.ne.s32.totalorder %v216, 0
        %vm225 = vcmp.ne.s32.totalorder %v223, 0
        %vm226 = vcmp.lt.s32.totalorder %v216, 0
        %vm227 = vcmp.lt.s32.totalorder %v223, 0
        %vm228 = vmand %vm226, %vm224
        %vm229 = vmand %vm227, %vm225
        %v230 = vadd.s32 %v216, 16
        %v231 = vadd.s32 %v223, 16
        %v232 = vsel %vm228, %v230, %v216
        %v233 = vsel %vm229, %v231, %v223
        %v234 = vadd.s32 %v232, 4294967295
        %v235 = vadd.s32 %v233, 4294967295
        %vm236 = vcmp.ge.s32.totalorder %v234, 0
        %vm237 = vcmp.ge.s32.totalorder %v235, 0
        %vm238 = vcmp.lt.s32.totalorder %v234, 16
        %vm239 = vcmp.lt.s32.totalorder %v235, 16
        %vm240 = vmand %vm236, %vm238
        %vm241 = vmand %vm237, %vm239
        %v242 = vadd.s32 %v232, 1
        %v243 = vadd.s32 %v233, 1
        %vm244 = vcmp.ge.s32.totalorder %v242, 0
        %vm245 = vcmp.ge.s32.totalorder %v243, 0
        %vm246 = vcmp.lt.s32.totalorder %v242, 16
        %vm247 = vcmp.lt.s32.totalorder %v243, 16
        %vm248 = vmand %vm244, %vm246
        %vm249 = vmand %vm245, %vm247
        %vm250 = vcmask 134144
        %251 = vst.msk [vmem:[#allocation2] sm:$0xf] %vm250, 0
        %252 = vst.msk [vmem:[#allocation2 + $0xc] sm:$0xf] %vm250, 0
        %253 = vst.msk [vmem:[#allocation2 + $0x18] sm:$0xf] %vm250, 0
        %254 = vst.msk [vmem:[#allocation2 + $0x24] sm:$0xf] %vm250, 0
        %vm255 = vcmask 273544
        %256 = vst.msk [vmem:[#allocation2 + $0x8] sm:$0xf] %vm255, 0
        %257 = vst.msk [vmem:[#allocation2 + $0x14] sm:$0xf] %vm255, 0
        %258 = vst.msk [vmem:[#allocation2 + $0x20] sm:$0xf] %vm255, 0
        %259 = vst.msk [vmem:[#allocation2 + $0x2c] sm:$0xf] %vm255, 0
        %v260 = vld [vmem:[%s177] sm:$0xff]
        %v261 = vld [vmem:[%s177 + $0x8] sm:$0xff]
        %v262 = vld [vmem:[%s177 + $0x10] sm:$0xff]
        %v263 = vld [vmem:[%s177 + $0x18] sm:$0xff]
        %268 = vrot.lane.b32.xlu0 %v260, 17
        %v269 = vpop.permute.xlu0 %268
        %270 = vrot.lane.b32.xlu0 %v261, 17
        %v271 = vpop.permute.xlu0 %270
        %272 = vrot.lane.b32.xlu0 %v262, 17
        %v273 = vpop.permute.xlu0 %272
        %274 = vrot.lane.b32.xlu0 %v263, 17
        %v275 = vpop.permute.xlu0 %274
        %v276 = vrot.slane %v269, 4
        %v277 = vrot.slane %v271, 4
        %v278 = vrot.slane %v273, 4
        %v279 = vrot.slane %v275, 4
        %vm280 = vcmask 138240
        %v281 = vsel %vm280, %v276, %v269
        %v282 = vsel %vm280, %v277, %v271
        %v283 = vsel %vm280, %v278, %v273
        %v284 = vsel %vm280, %v279, %v275
        %vm293 = vcmask 1043592
        %vm294 = vcmask 1047556
        %vm295 = vmor %vm294, %vm293
        %296 = vst.msk [vmem:[#allocation2] sm:$0xff] %vm295, %v281
        %297 = vst.msk [vmem:[#allocation2 + $0x8] sm:$0xf] %vm250, %v276
        %298 = vst.msk [vmem:[#allocation2 + $0xc] sm:$0xff] %vm295, %v282
        %299 = vst.msk [vmem:[#allocation2 + $0x14] sm:$0xf] %vm250, %v277
        %300 = vst.msk [vmem:[#allocation2 + $0x18] sm:$0xff] %vm295, %v283
        %301 = vst.msk [vmem:[#allocation2 + $0x20] sm:$0xf] %vm250, %v278
        %302 = vst.msk [vmem:[#allocation2 + $0x24] sm:$0xff] %vm295, %v284
        %303 = vst.msk [vmem:[#allocation2 + $0x2c] sm:$0xf] %vm250, %v279
        %v304 = vld [vmem:[#allocation2] sm:$0xff]
        %v305 = vld [vmem:[#allocation2 + $0xc] sm:$0xff]
        %v306 = vld [vmem:[#allocation2 + $0x18] sm:$0xff]
        %v307 = vld [vmem:[#allocation2 + $0x24] sm:$0xff]
        %vm308 = vmpackc.low %vm241, %vm240
        %v309 = vsel %vm308, %v304, 0
        %v310 = vsel %vm308, %v305, 0
        %v311 = vsel %vm308, %v306, 0
        %v312 = vsel %vm308, %v307, 0
        %313 = vst [vmem:[#allocation3] sm:$0xff] %v309
        %314 = vst [vmem:[#allocation3 + $0x8] sm:$0xff] %v310
        %315 = vst [vmem:[#allocation3 + $0x10] sm:$0xff] %v311
        %316 = vst [vmem:[#allocation3 + $0x18] sm:$0xff] %v312
        %v317 = vld [vmem:[#allocation2] sm:$0xff]
        %v318 = vld [vmem:[#allocation2 + $0x8] sm:$0xf]
        %v319 = vld [vmem:[#allocation2 + $0xc] sm:$0xff]
        %v320 = vld [vmem:[#allocation2 + $0x14] sm:$0xf]
        %v321 = vld [vmem:[#allocation2 + $0x18] sm:$0xff]
        %v322 = vld [vmem:[#allocation2 + $0x20] sm:$0xf]
        %v323 = vld [vmem:[#allocation2 + $0x24] sm:$0xff]
        %v324 = vld [vmem:[#allocation2 + $0x2c] sm:$0xf]
        %333 = vrot.lane.b32.xlu0 %v317, 127
        %v334 = vpop.permute.xlu0 %333
        %335 = vrot.lane.b32.xlu0 %v318, 127
        %v336 = vpop.permute.xlu0 %335
        %337 = vrot.lane.b32.xlu0 %v319, 127
        %v338 = vpop.permute.xlu0 %337
        %339 = vrot.lane.b32.xlu0 %v320, 127
        %v340 = vpop.permute.xlu0 %339
        %341 = vrot.lane.b32.xlu0 %v321, 127
        %v342 = vpop.permute.xlu0 %341
        %343 = vrot.lane.b32.xlu0 %v322, 127
        %v344 = vpop.permute.xlu0 %343
        %345 = vrot.lane.b32.xlu0 %v323, 127
        %v346 = vpop.permute.xlu0 %345
        %347 = vrot.lane.b32.xlu0 %v324, 127
        %v348 = vpop.permute.xlu0 %347
        %v349 = vrot.slane %v334, 4
        %v350 = vrot.slane %v336, 4
        %v351 = vrot.slane %v338, 4
        %v352 = vrot.slane %v340, 4
        %v353 = vrot.slane %v342, 4
        %v354 = vrot.slane %v344, 4
        %v355 = vrot.slane %v346, 4
        %v356 = vrot.slane %v348, 4
        %vm357 = vcmask 1043456
        %v358 = vsel %vm357, %v349, %v350
        %vm359 = vcmask 1039360
        %v360 = vsel %vm359, %v334, %v358
        %v361 = vsel %vm357, %v351, %v352
        %v362 = vsel %vm359, %v338, %v361
        %v363 = vsel %vm357, %v353, %v354
        %v364 = vsel %vm359, %v342, %v363
        %v365 = vsel %vm357, %v355, %v356
        %v366 = vsel %vm359, %v346, %v365
        %371 = vst [vmem:[#allocation3 + $0x20] sm:$0xff] %v360
        %372 = vst [vmem:[#allocation3 + $0x28] sm:$0xff] %v362
        %373 = vst [vmem:[#allocation3 + $0x30] sm:$0xff] %v364
        %374 = vst [vmem:[#allocation3 + $0x38] sm:$0xff] %v366
        %v375 = vld [vmem:[#allocation2] sm:$0xff]
        %v376 = vld [vmem:[#allocation2 + $0x8] sm:$0xf]
        %v377 = vld [vmem:[#allocation2 + $0xc] sm:$0xff]
        %v378 = vld [vmem:[#allocation2 + $0x14] sm:$0xf]
        %v379 = vld [vmem:[#allocation2 + $0x18] sm:$0xff]
        %v380 = vld [vmem:[#allocation2 + $0x20] sm:$0xf]
        %v381 = vld [vmem:[#allocation2 + $0x24] sm:$0xff]
        %v382 = vld [vmem:[#allocation2 + $0x2c] sm:$0xf]
        %vm383 = vmpackc.low %vm249, %vm248
        %v384 = vsel %vm383, 65537, 0
        %385 = vrot.lane.b32.xlu0 %v384, 2
        %v386 = vpop.permute.xlu0 %385
        %v387 = vrot.slane %v386, 4
        %vm388 = vcmask 15360
        %v389 = vsel %vm388, %v387, %v386
        %vm390 = vcmp.ne.s16.totalorder %v389, 0
        %vm391 = vcmp.ne.s16.totalorder %v387, 0
        %v392 = vsel %vm390, %v375, 0
        %v393 = vsel %vm391, %v376, 0
        %v394 = vsel %vm390, %v377, 0
        %v395 = vsel %vm391, %v378, 0
        %v396 = vsel %vm390, %v379, 0
        %v397 = vsel %vm391, %v380, 0
        %v398 = vsel %vm390, %v381, 0
        %v399 = vsel %vm391, %v382, 0
        %408 = vrot.lane.b32.xlu0 %v392, 126
        %v409 = vpop.permute.xlu0 %408
        %410 = vrot.lane.b32.xlu0 %v393, 126
        %v411 = vpop.permute.xlu0 %410
        %412 = vrot.lane.b32.xlu0 %v394, 126
        %v413 = vpop.permute.xlu0 %412
        %414 = vrot.lane.b32.xlu0 %v395, 126
        %v415 = vpop.permute.xlu0 %414
        %416 = vrot.lane.b32.xlu0 %v396, 126
        %v417 = vpop.permute.xlu0 %416
        %418 = vrot.lane.b32.xlu0 %v397, 126
        %v419 = vpop.permute.xlu0 %418
        %420 = vrot.lane.b32.xlu0 %v398, 126
        %v421 = vpop.permute.xlu0 %420
        %422 = vrot.lane.b32.xlu0 %v399, 126
        %v423 = vpop.permute.xlu0 %422
        %v424 = vrot.slane %v409, 4
        %v425 = vrot.slane %v411, 4
        %v426 = vrot.slane %v413, 4
        %v427 = vrot.slane %v415, 4
        %v428 = vrot.slane %v417, 4
        %v429 = vrot.slane %v419, 4
        %v430 = vrot.slane %v421, 4
        %v431 = vrot.slane %v423, 4
        %v432 = vsel %vm357, %v424, %v425
        %vm433 = vcmask 1031168
        %v434 = vsel %vm433, %v409, %v432
        %v435 = vsel %vm357, %v426, %v427
        %v436 = vsel %vm433, %v413, %v435
        %v437 = vsel %vm357, %v428, %v429
        %v438 = vsel %vm433, %v417, %v437
        %v439 = vsel %vm357, %v430, %v431
        %v440 = vsel %vm433, %v421, %v439
        %445 = vst [vmem:[#allocation3 + $0x40] sm:$0xff] %v434
        %446 = vst [vmem:[#allocation3 + $0x48] sm:$0xff] %v436
        %447 = vst [vmem:[#allocation3 + $0x50] sm:$0xff] %v438
        %448 = vst [vmem:[#allocation3 + $0x58] sm:$0xff] %v440
        %v449 = vld [vmem:[#allocation2] sm:$0xff]
        %v450 = vld [vmem:[#allocation2 + $0x8] sm:$0xf]
        %v451 = vld [vmem:[#allocation2 + $0xc] sm:$0xff]
        %v452 = vld [vmem:[#allocation2 + $0x14] sm:$0xf]
        %v453 = vld [vmem:[#allocation2 + $0x18] sm:$0xff]
        %v454 = vld [vmem:[#allocation2 + $0x20] sm:$0xf]
        %v455 = vld [vmem:[#allocation2 + $0x24] sm:$0xff]
        %v456 = vld [vmem:[#allocation2 + $0x2c] sm:$0xf]
        %v457 = vsel %vm308, 65537, 0
        %458 = vrot.lane.b32.xlu0 %v457, 16
        %v459 = vpop.permute.xlu0 %458
        %v460 = vrot.slane %v459, 4
        %vm461 = vcmask 130048
        %v462 = vsel %vm461, %v460, %v459
        %vm463 = vcmp.ne.s16.totalorder %v462, 0
        %vm464 = vcmp.ne.s16.totalorder %v460, 0
        %v465 = vsel %vm463, %v449, 0
        %v466 = vsel %vm464, %v450, 0
        %v467 = vsel %vm463, %v451, 0
        %v468 = vsel %vm464, %v452, 0
        %v469 = vsel %vm463, %v453, 0
        %v470 = vsel %vm464, %v454, 0
        %v471 = vsel %vm463, %v455, 0
        %v472 = vsel %vm464, %v456, 0
        %481 = vrot.lane.b32.xlu0 %v465, 112
        %v482 = vpop.permute.xlu0 %481
        %483 = vrot.lane.b32.xlu0 %v466, 112
        %v484 = vpop.permute.xlu0 %483
        %485 = vrot.lane.b32.xlu0 %v467, 112
        %v486 = vpop.permute.xlu0 %485
        %487 = vrot.lane.b32.xlu0 %v468, 112
        %v488 = vpop.permute.xlu0 %487
        %489 = vrot.lane.b32.xlu0 %v469, 112
        %v490 = vpop.permute.xlu0 %489
        %491 = vrot.lane.b32.xlu0 %v470, 112
        %v492 = vpop.permute.xlu0 %491
        %493 = vrot.lane.b32.xlu0 %v471, 112
        %v494 = vpop.permute.xlu0 %493
        %495 = vrot.lane.b32.xlu0 %v472, 112
        %v496 = vpop.permute.xlu0 %495
        %v497 = vrot.slane %v482, 4
        %v498 = vrot.slane %v484, 4
        %v499 = vrot.slane %v486, 4
        %v500 = vrot.slane %v488, 4
        %v501 = vrot.slane %v490, 4
        %v502 = vrot.slane %v492, 4
        %v503 = vrot.slane %v494, 4
        %v504 = vrot.slane %v496, 4
        %v505 = vsel %vm357, %v497, %v498
        %vm506 = vcmask 916480
        %v507 = vsel %vm506, %v482, %v505
        %v508 = vsel %vm357, %v499, %v500
        %v509 = vsel %vm506, %v486, %v508
        %v510 = vsel %vm357, %v501, %v502
        %v511 = vsel %vm506, %v490, %v510
        %v512 = vsel %vm357, %v503, %v504
        %v513 = vsel %vm506, %v494, %v512
        %518 = vst [vmem:[#allocation3 + $0x60] sm:$0xff] %v507
        %519 = vst [vmem:[#allocation3 + $0x68] sm:$0xff] %v509
        %520 = vst [vmem:[#allocation3 + $0x70] sm:$0xff] %v511
        %521 = vst [vmem:[#allocation3 + $0x78] sm:$0xff] %v513
        %v522 = vld [vmem:[#allocation2] sm:$0xff]
        %v523 = vld [vmem:[#allocation2 + $0x8] sm:$0xf]
        %v524 = vld [vmem:[#allocation2 + $0xc] sm:$0xff]
        %v525 = vld [vmem:[#allocation2 + $0x14] sm:$0xf]
        %v526 = vld [vmem:[#allocation2 + $0x18] sm:$0xff]
        %v527 = vld [vmem:[#allocation2 + $0x20] sm:$0xf]
        %v528 = vld [vmem:[#allocation2 + $0x24] sm:$0xff]
        %v529 = vld [vmem:[#allocation2 + $0x2c] sm:$0xf]
        %538 = vrot.lane.b32.xlu0 %v522, 111
        %v539 = vpop.permute.xlu0 %538
        %540 = vrot.lane.b32.xlu0 %v523, 111
        %v541 = vpop.permute.xlu0 %540
        %542 = vrot.lane.b32.xlu0 %v524, 111
        %v543 = vpop.permute.xlu0 %542
        %544 = vrot.lane.b32.xlu0 %v525, 111
        %v545 = vpop.permute.xlu0 %544
        %546 = vrot.lane.b32.xlu0 %v526, 111
        %v547 = vpop.permute.xlu0 %546
        %548 = vrot.lane.b32.xlu0 %v527, 111
        %v549 = vpop.permute.xlu0 %548
        %550 = vrot.lane.b32.xlu0 %v528, 111
        %v551 = vpop.permute.xlu0 %550
        %552 = vrot.lane.b32.xlu0 %v529, 111
        %v553 = vpop.permute.xlu0 %552
        %v554 = vrot.slane %v539, 4
        %v555 = vrot.slane %v541, 4
        %v556 = vrot.slane %v543, 4
        %v557 = vrot.slane %v545, 4
        %v558 = vrot.slane %v547, 4
        %v559 = vrot.slane %v549, 4
        %v560 = vrot.slane %v551, 4
        %v561 = vrot.slane %v553, 4
        %v562 = vsel %vm357, %v554, %v555
        %vm563 = vcmask 908288
        %v564 = vsel %vm563, %v539, %v562
        %v565 = vsel %vm357, %v556, %v557
        %v566 = vsel %vm563, %v543, %v565
        %v567 = vsel %vm357, %v558, %v559
        %v568 = vsel %vm563, %v547, %v567
        %v569 = vsel %vm357, %v560, %v561
        %v570 = vsel %vm563, %v551, %v569
        %575 = vst [vmem:[#allocation3 + $0x80] sm:$0xff] %v564
        %576 = vst [vmem:[#allocation3 + $0x88] sm:$0xff] %v566
        %577 = vst [vmem:[#allocation3 + $0x90] sm:$0xff] %v568
        %578 = vst [vmem:[#allocation3 + $0x98] sm:$0xff] %v570
        %v579 = vld [vmem:[#allocation2] sm:$0xff]
        %v580 = vld [vmem:[#allocation2 + $0x8] sm:$0xf]
        %v581 = vld [vmem:[#allocation2 + $0xc] sm:$0xff]
        %v582 = vld [vmem:[#allocation2 + $0x14] sm:$0xf]
        %v583 = vld [vmem:[#allocation2 + $0x18] sm:$0xff]
        %v584 = vld [vmem:[#allocation2 + $0x20] sm:$0xf]
        %v585 = vld [vmem:[#allocation2 + $0x24] sm:$0xff]
        %v586 = vld [vmem:[#allocation2 + $0x2c] sm:$0xf]
        %587 = vrot.lane.b32.xlu0 %v384, 18
        %v588 = vpop.permute.xlu0 %587
        %v589 = vrot.slane %v588, 4
        %vm590 = vcmask 146432
        %v591 = vsel %vm590, %v589, %v588
        %vm592 = vcmp.ne.s16.totalorder %v591, 0
        %vm593 = vcmp.ne.s16.totalorder %v589, 0
        %v594 = vsel %vm592, %v579, 0
        %v595 = vsel %vm593, %v580, 0
        %v596 = vsel %vm592, %v581, 0
        %v597 = vsel %vm593, %v582, 0
        %v598 = vsel %vm592, %v583, 0
        %v599 = vsel %vm593, %v584, 0
        %v600 = vsel %vm592, %v585, 0
        %v601 = vsel %vm593, %v586, 0
        %610 = vrot.lane.b32.xlu0 %v594, 110
        %v611 = vpop.permute.xlu0 %610
        %612 = vrot.lane.b32.xlu0 %v595, 110
        %v613 = vpop.permute.xlu0 %612
        %614 = vrot.lane.b32.xlu0 %v596, 110
        %v615 = vpop.permute.xlu0 %614
        %616 = vrot.lane.b32.xlu0 %v597, 110
        %v617 = vpop.permute.xlu0 %616
        %618 = vrot.lane.b32.xlu0 %v598, 110
        %v619 = vpop.permute.xlu0 %618
        %620 = vrot.lane.b32.xlu0 %v599, 110
        %v621 = vpop.permute.xlu0 %620
        %622 = vrot.lane.b32.xlu0 %v600, 110
        %v623 = vpop.permute.xlu0 %622
        %624 = vrot.lane.b32.xlu0 %v601, 110
        %v625 = vpop.permute.xlu0 %624
        %v626 = vrot.slane %v611, 4
        %v627 = vrot.slane %v613, 4
        %v628 = vrot.slane %v615, 4
        %v629 = vrot.slane %v617, 4
        %v630 = vrot.slane %v619, 4
        %v631 = vrot.slane %v621, 4
        %v632 = vrot.slane %v623, 4
        %v633 = vrot.slane %v625, 4
        %v634 = vsel %vm357, %v626, %v627
        %vm635 = vcmask 900096
        %v636 = vsel %vm635, %v611, %v634
        %v637 = vsel %vm357, %v628, %v629
        %v638 = vsel %vm635, %v615, %v637
        %v639 = vsel %vm357, %v630, %v631
        %v640 = vsel %vm635, %v619, %v639
        %v641 = vsel %vm357, %v632, %v633
        %v642 = vsel %vm635, %v623, %v641
        %647 = vst [vmem:[#allocation3 + $0xa0] sm:$0xff] %v636
        %648 = vst [vmem:[#allocation3 + $0xa8] sm:$0xff] %v638
        %649 = vst [vmem:[#allocation3 + $0xb0] sm:$0xff] %v640
        %650 = vst [vmem:[#allocation3 + $0xb8] sm:$0xff] %v642
        %v651 = vld [vmem:[#allocation2] sm:$0xff]
        %v652 = vld [vmem:[#allocation2 + $0x8] sm:$0xf]
        %v653 = vld [vmem:[#allocation2 + $0xc] sm:$0xff]
        %v654 = vld [vmem:[#allocation2 + $0x14] sm:$0xf]
        %v655 = vld [vmem:[#allocation2 + $0x18] sm:$0xff]
        %v656 = vld [vmem:[#allocation2 + $0x20] sm:$0xf]
        %v657 = vld [vmem:[#allocation2 + $0x24] sm:$0xff]
        %v658 = vld [vmem:[#allocation2 + $0x2c] sm:$0xf]
        %659 = vrot.lane.b32.xlu0 %v457, 32
        %v660 = vpop.permute.xlu0 %659
        %v661 = vrot.slane %v660, 4
        %vm662 = vcmask 261120
        %v663 = vsel %vm662, %v661, %v660
        %vm664 = vcmp.ne.s16.totalorder %v663, 0
        %vm665 = vcmp.ne.s16.totalorder %v661, 0
        %v666 = vsel %vm664, %v651, 0
        %v667 = vsel %vm665, %v652, 0
        %v668 = vsel %vm664, %v653, 0
        %v669 = vsel %vm665, %v654, 0
        %v670 = vsel %vm664, %v655, 0
        %v671 = vsel %vm665, %v656, 0
        %v672 = vsel %vm664, %v657, 0
        %v673 = vsel %vm665, %v658, 0
        %682 = vrot.lane.b32.xlu0 %v666, 96
        %v683 = vpop.permute.xlu0 %682
        %684 = vrot.lane.b32.xlu0 %v667, 96
        %v685 = vpop.permute.xlu0 %684
        %686 = vrot.lane.b32.xlu0 %v668, 96
        %v687 = vpop.permute.xlu0 %686
        %688 = vrot.lane.b32.xlu0 %v669, 96
        %v689 = vpop.permute.xlu0 %688
        %690 = vrot.lane.b32.xlu0 %v670, 96
        %v691 = vpop.permute.xlu0 %690
        %692 = vrot.lane.b32.xlu0 %v671, 96
        %v693 = vpop.permute.xlu0 %692
        %694 = vrot.lane.b32.xlu0 %v672, 96
        %v695 = vpop.permute.xlu0 %694
        %696 = vrot.lane.b32.xlu0 %v673, 96
        %v697 = vpop.permute.xlu0 %696
        %v698 = vrot.slane %v683, 4
        %v699 = vrot.slane %v685, 4
        %v700 = vrot.slane %v687, 4
        %v701 = vrot.slane %v689, 4
        %v702 = vrot.slane %v691, 4
        %v703 = vrot.slane %v693, 4
        %v704 = vrot.slane %v695, 4
        %v705 = vrot.slane %v697, 4
        %v706 = vsel %vm357, %v698, %v699
        %vm707 = vcmask 785408
        %v708 = vsel %vm707, %v683, %v706
        %v709 = vsel %vm357, %v700, %v701
        %v710 = vsel %vm707, %v687, %v709
        %v711 = vsel %vm357, %v702, %v703
        %v712 = vsel %vm707, %v691, %v711
        %v713 = vsel %vm357, %v704, %v705
        %v714 = vsel %vm707, %v695, %v713
        %719 = vst [vmem:[#allocation3 + $0xc0] sm:$0xff] %v708
        %720 = vst [vmem:[#allocation3 + $0xc8] sm:$0xff] %v710
        %721 = vst [vmem:[#allocation3 + $0xd0] sm:$0xff] %v712
        %722 = vst [vmem:[#allocation3 + $0xd8] sm:$0xff] %v714
        %v723 = vld [vmem:[#allocation2] sm:$0xff]
        %v724 = vld [vmem:[#allocation2 + $0x8] sm:$0xf]
        %v725 = vld [vmem:[#allocation2 + $0xc] sm:$0xff]
        %v726 = vld [vmem:[#allocation2 + $0x14] sm:$0xf]
        %v727 = vld [vmem:[#allocation2 + $0x18] sm:$0xff]
        %v728 = vld [vmem:[#allocation2 + $0x20] sm:$0xf]
        %v729 = vld [vmem:[#allocation2 + $0x24] sm:$0xff]
        %v730 = vld [vmem:[#allocation2 + $0x2c] sm:$0xf]
        %739 = vrot.lane.b32.xlu0 %v723, 95
        %v740 = vpop.permute.xlu0 %739
        %741 = vrot.lane.b32.xlu0 %v724, 95
        %v742 = vpop.permute.xlu0 %741
        %743 = vrot.lane.b32.xlu0 %v725, 95
        %v744 = vpop.permute.xlu0 %743
        %745 = vrot.lane.b32.xlu0 %v726, 95
        %v746 = vpop.permute.xlu0 %745
        %747 = vrot.lane.b32.xlu0 %v727, 95
        %v748 = vpop.permute.xlu0 %747
        %749 = vrot.lane.b32.xlu0 %v728, 95
        %v750 = vpop.permute.xlu0 %749
        %751 = vrot.lane.b32.xlu0 %v729, 95
        %v752 = vpop.permute.xlu0 %751
        %753 = vrot.lane.b32.xlu0 %v730, 95
        %v754 = vpop.permute.xlu0 %753
        %v755 = vrot.slane %v740, 4
        %v756 = vrot.slane %v742, 4
        %v757 = vrot.slane %v744, 4
        %v758 = vrot.slane %v746, 4
        %v759 = vrot.slane %v748, 4
        %v760 = vrot.slane %v750, 4
        %v761 = vrot.slane %v752, 4
        %v762 = vrot.slane %v754, 4
        %v763 = vsel %vm357, %v755, %v756
        %vm764 = vcmask 777216
        %v765 = vsel %vm764, %v740, %v763
        %v766 = vsel %vm357, %v757, %v758
        %v767 = vsel %vm764, %v744, %v766
        %v768 = vsel %vm357, %v759, %v760
        %v769 = vsel %vm764, %v748, %v768
        %v770 = vsel %vm357, %v761, %v762
        %v771 = vsel %vm764, %v752, %v770
        %776 = vst [vmem:[#allocation3 + $0xe0] sm:$0xff] %v765
        %777 = vst [vmem:[#allocation3 + $0xe8] sm:$0xff] %v767
        %778 = vst [vmem:[#allocation3 + $0xf0] sm:$0xff] %v769
        %779 = vst [vmem:[#allocation3 + $0xf8] sm:$0xff] %v771
        %v780 = vld [vmem:[#allocation2] sm:$0xff]
        %v781 = vld [vmem:[#allocation2 + $0x8] sm:$0xf]
        %v782 = vld [vmem:[#allocation2 + $0xc] sm:$0xff]
        %v783 = vld [vmem:[#allocation2 + $0x14] sm:$0xf]
        %v784 = vld [vmem:[#allocation2 + $0x18] sm:$0xff]
        %v785 = vld [vmem:[#allocation2 + $0x20] sm:$0xf]
        %v786 = vld [vmem:[#allocation2 + $0x24] sm:$0xff]
        %v787 = vld [vmem:[#allocation2 + $0x2c] sm:$0xf]
        %788 = vrot.lane.b32.xlu0 %v384, 34
        %v789 = vpop.permute.xlu0 %788
        %v790 = vrot.slane %v789, 4
        %vm791 = vcmask 277504
        %v792 = vsel %vm791, %v790, %v789
        %vm793 = vcmp.ne.s16.totalorder %v792, 0
        %vm794 = vcmp.ne.s16.totalorder %v790, 0
        %v795 = vsel %vm793, %v780, 0
        %v796 = vsel %vm794, %v781, 0
        %v797 = vsel %vm793, %v782, 0
        %v798 = vsel %vm794, %v783, 0
        %v799 = vsel %vm793, %v784, 0
        %v800 = vsel %vm794, %v785, 0
        %v801 = vsel %vm793, %v786, 0
        %v802 = vsel %vm794, %v787, 0
        %811 = vrot.lane.b32.xlu0 %v795, 94
        %v812 = vpop.permute.xlu0 %811
        %813 = vrot.lane.b32.xlu0 %v796, 94
        %v814 = vpop.permute.xlu0 %813
        %815 = vrot.lane.b32.xlu0 %v797, 94
        %v816 = vpop.permute.xlu0 %815
        %817 = vrot.lane.b32.xlu0 %v798, 94
        %v818 = vpop.permute.xlu0 %817
        %819 = vrot.lane.b32.xlu0 %v799, 94
        %v820 = vpop.permute.xlu0 %819
        %821 = vrot.lane.b32.xlu0 %v800, 94
        %v822 = vpop.permute.xlu0 %821
        %823 = vrot.lane.b32.xlu0 %v801, 94
        %v824 = vpop.permute.xlu0 %823
        %825 = vrot.lane.b32.xlu0 %v802, 94
        %v826 = vpop.permute.xlu0 %825
        %v827 = vrot.slane %v812, 4
        %v828 = vrot.slane %v814, 4
        %v829 = vrot.slane %v816, 4
        %v830 = vrot.slane %v818, 4
        %v831 = vrot.slane %v820, 4
        %v832 = vrot.slane %v822, 4
        %v833 = vrot.slane %v824, 4
        %v834 = vrot.slane %v826, 4
        %v835 = vsel %vm357, %v827, %v828
        %vm836 = vcmask 769024
        %v837 = vsel %vm836, %v812, %v835
        %v838 = vsel %vm357, %v829, %v830
        %v839 = vsel %vm836, %v816, %v838
        %v840 = vsel %vm357, %v831, %v832
        %v841 = vsel %vm836, %v820, %v840
        %v842 = vsel %vm357, %v833, %v834
        %v843 = vsel %vm836, %v824, %v842
        %848 = vst [vmem:[#allocation3 + $0x100] sm:$0xff] %v837
        %849 = vst [vmem:[#allocation3 + $0x108] sm:$0xff] %v839
        %850 = vst [vmem:[#allocation3 + $0x110] sm:$0xff] %v841
        %851 = vst [vmem:[#allocation3 + $0x118] sm:$0xff] %v843
        %v852 = vld [vmem:[#allocation7] sm:$0xff]
        %v853 = vld [vmem:[#allocation7 + $0x8] sm:$0xf]
        %v854 = vld [vmem:[#allocation7 + $0xc] sm:$0xff]
        %v855 = vld [vmem:[#allocation7 + $0x14] sm:$0xf]
        %v856 = vld [vmem:[#allocation7 + $0x18] sm:$0xff]
        %v857 = vld [vmem:[#allocation7 + $0x20] sm:$0xf]
        %v858 = vld [vmem:[#allocation7 + $0x24] sm:$0xff]
        %v859 = vld [vmem:[#allocation7 + $0x2c] sm:$0xf]
        %v860 = vld [vmem:[#allocation3] sm:$0xff]
        %v861 = vld [vmem:[#allocation3 + $0x8] sm:$0xff]
        %v862 = vld [vmem:[#allocation3 + $0x10] sm:$0xff]
        %v863 = vld [vmem:[#allocation3 + $0x18] sm:$0xff]
        %v864 = vld [vmem:[#allocation3 + $0x20] sm:$0xff]
        %v865 = vld [vmem:[#allocation3 + $0x28] sm:$0xff]
        %v866 = vld [vmem:[#allocation3 + $0x30] sm:$0xff]
        %v867 = vld [vmem:[#allocation3 + $0x38] sm:$0xff]
        %v868 = vld [vmem:[#allocation3 + $0x40] sm:$0xff]
        %v869 = vld [vmem:[#allocation3 + $0x48] sm:$0xff]
        %v870 = vld [vmem:[#allocation3 + $0x50] sm:$0xff]
        %v871 = vld [vmem:[#allocation3 + $0x58] sm:$0xff]
        %v872 = vld [vmem:[#allocation3 + $0x60] sm:$0xff]
        %v873 = vld [vmem:[#allocation3 + $0x68] sm:$0xff]
        %v874 = vld [vmem:[#allocation3 + $0x70] sm:$0xff]
        %v875 = vld [vmem:[#allocation3 + $0x78] sm:$0xff]
        %v876 = vld [vmem:[#allocation3 + $0x80] sm:$0xff]
        %v877 = vld [vmem:[#allocation3 + $0x88] sm:$0xff]
        %v878 = vld [vmem:[#allocation3 + $0x90] sm:$0xff]
        %v879 = vld [vmem:[#allocation3 + $0x98] sm:$0xff]
        %v880 = vld [vmem:[#allocation3 + $0xa0] sm:$0xff]
        %v881 = vld [vmem:[#allocation3 + $0xa8] sm:$0xff]
        %v882 = vld [vmem:[#allocation3 + $0xb0] sm:$0xff]
        %v883 = vld [vmem:[#allocation3 + $0xb8] sm:$0xff]
        %v884 = vld [vmem:[#allocation3 + $0xc0] sm:$0xff]
        %v885 = vld [vmem:[#allocation3 + $0xc8] sm:$0xff]
        %v886 = vld [vmem:[#allocation3 + $0xd0] sm:$0xff]
        %v887 = vld [vmem:[#allocation3 + $0xd8] sm:$0xff]
        %v888 = vld [vmem:[#allocation3 + $0xe0] sm:$0xff]
        %v889 = vld [vmem:[#allocation3 + $0xe8] sm:$0xff]
        %v890 = vld [vmem:[#allocation3 + $0xf0] sm:$0xff]
        %v891 = vld [vmem:[#allocation3 + $0xf8] sm:$0xff]
        %v892 = vld [vmem:[#allocation3 + $0x100] sm:$0xff]
        %v893 = vld [vmem:[#allocation3 + $0x108] sm:$0xff]
        %v894 = vld [vmem:[#allocation3 + $0x110] sm:$0xff]
        %v895 = vld [vmem:[#allocation3 + $0x118] sm:$0xff]
        %v896 = vld [vmem:[%s2] sm:$0xff]
        %v897 = vld [vmem:[%s2 + $0x8] sm:$0xff]
        %v898 = vld [vmem:[%s2 + $0x10] sm:$0xff]
        %v899 = vld [vmem:[%s2 + $0x18] sm:$0xff]
        %901 = vset.pattern.permute.xlu0 0
        %902 = vperm.xlu0 %901, %v896
        %v903 = vpop.permute.xlu0 %902
        %906 = vset.pattern.permute.xlu0 0
        %907 = vperm.xlu0 %906, %v897
        %v908 = vpop.permute.xlu0 %907
        %911 = vset.pattern.permute.xlu0 0
        %912 = vperm.xlu0 %911, %v898
        %v913 = vpop.permute.xlu0 %912
        %916 = vset.pattern.permute.xlu0 0
        %917 = vperm.xlu0 %916, %v899
        %v918 = vpop.permute.xlu0 %917
        %v928 = vunpack.c.l.b16 %v852
        %v929 = vunpack.c.h.b16 %v852
        %v930 = vunpack.c.l.b16 %v853
        %v931 = vunpack.c.l.b16 %v854
        %v932 = vunpack.c.h.b16 %v854
        %v933 = vunpack.c.l.b16 %v855
        %v934 = vunpack.c.l.b16 %v856
        %v935 = vunpack.c.h.b16 %v856
        %v936 = vunpack.c.l.b16 %v857
        %v937 = vunpack.c.l.b16 %v858
        %v938 = vunpack.c.h.b16 %v858
        %v939 = vunpack.c.l.b16 %v859
        %v940 = vpack.c.b16 %v931, %v928
        %v941 = vpack.c.b16 %v932, %v929
        %v942 = vpack.c.b16 %v933, %v930
        %v943 = vpack.c.b16 %v937, %v934
        %v944 = vpack.c.b16 %v938, %v935
        %v945 = vpack.c.b16 %v939, %v936
        %v986 = vunpack.c.l.b16 %v860
        %v987 = vunpack.c.h.b16 %v860
        %v988 = vunpack.c.l.b16 %v861
        %v989 = vunpack.c.h.b16 %v861
        %v990 = vunpack.c.l.b16 %v862
        %v991 = vunpack.c.h.b16 %v862
        %v992 = vunpack.c.l.b16 %v863
        %v993 = vunpack.c.h.b16 %v863
        %v994 = vunpack.c.l.b16 %v864
        %v995 = vunpack.c.h.b16 %v864
        %v996 = vunpack.c.l.b16 %v865
        %v997 = vunpack.c.h.b16 %v865
        %v998 = vunpack.c.l.b16 %v866
        %v999 = vunpack.c.h.b16 %v866
        %v1000 = vunpack.c.l.b16 %v867
        %v1001 = vunpack.c.h.b16 %v867
        %v1002 = vunpack.c.l.b16 %v868
        %v1003 = vunpack.c.h.b16 %v868
        %v1004 = vunpack.c.l.b16 %v869
        %v1005 = vunpack.c.h.b16 %v869
        %v1006 = vunpack.c.l.b16 %v870
        %v1007 = vunpack.c.h.b16 %v870
        %v1008 = vunpack.c.l.b16 %v871
        %v1009 = vunpack.c.h.b16 %v871
        %v1010 = vunpack.c.l.b16 %v872
        %v1011 = vunpack.c.h.b16 %v872
        %v1012 = vunpack.c.l.b16 %v873
        %v1013 = vunpack.c.h.b16 %v873
        %v1014 = vunpack.c.l.b16 %v874
        %v1015 = vunpack.c.h.b16 %v874
        %v1016 = vunpack.c.l.b16 %v875
        %v1017 = vunpack.c.h.b16 %v875
        %v1018 = vunpack.c.l.b16 %v876
        %v1019 = vunpack.c.h.b16 %v876
        %v1020 = vunpack.c.l.b16 %v877
        %v1021 = vunpack.c.h.b16 %v877
        %v1022 = vunpack.c.l.b16 %v878
        %v1023 = vunpack.c.h.b16 %v878
        %v1024 = vunpack.c.l.b16 %v879
        %v1025 = vunpack.c.h.b16 %v879
        %v1026 = vunpack.c.l.b16 %v880
        %v1027 = vunpack.c.h.b16 %v880
        %v1028 = vunpack.c.l.b16 %v881
        %v1029 = vunpack.c.h.b16 %v881
        %v1030 = vunpack.c.l.b16 %v882
        %v1031 = vunpack.c.h.b16 %v882
        %v1032 = vunpack.c.l.b16 %v883
        %v1033 = vunpack.c.h.b16 %v883
        %v1034 = vunpack.c.l.b16 %v884
        %v1035 = vunpack.c.h.b16 %v884
        %v1036 = vunpack.c.l.b16 %v885
        %v1037 = vunpack.c.h.b16 %v885
        %v1038 = vunpack.c.l.b16 %v886
        %v1039 = vunpack.c.h.b16 %v886
        %v1040 = vunpack.c.l.b16 %v887
        %v1041 = vunpack.c.h.b16 %v887
        %v1042 = vunpack.c.l.b16 %v888
        %v1043 = vunpack.c.h.b16 %v888
        %v1044 = vunpack.c.l.b16 %v889
        %v1045 = vunpack.c.h.b16 %v889
        %v1046 = vunpack.c.l.b16 %v890
        %v1047 = vunpack.c.h.b16 %v890
        %v1048 = vunpack.c.l.b16 %v891
        %v1049 = vunpack.c.h.b16 %v891
        %v1050 = vunpack.c.l.b16 %v892
        %v1051 = vunpack.c.h.b16 %v892
        %v1052 = vunpack.c.l.b16 %v893
        %v1053 = vunpack.c.h.b16 %v893
        %v1054 = vunpack.c.l.b16 %v894
        %v1055 = vunpack.c.h.b16 %v894
        %v1056 = vunpack.c.l.b16 %v895
        %v1057 = vunpack.c.h.b16 %v895
        %v1058 = vpack.c.b16 %v988, %v986
        %v1059 = vpack.c.b16 %v989, %v987
        %v1060 = vpack.c.b16 %v992, %v990
        %v1061 = vpack.c.b16 %v993, %v991
        %v1062 = vpack.c.b16 %v996, %v994
        %v1063 = vpack.c.b16 %v997, %v995
        %v1064 = vpack.c.b16 %v1000, %v998
        %v1065 = vpack.c.b16 %v1001, %v999
        %v1066 = vpack.c.b16 %v1004, %v1002
        %v1067 = vpack.c.b16 %v1005, %v1003
        %v1068 = vpack.c.b16 %v1008, %v1006
        %v1069 = vpack.c.b16 %v1009, %v1007
        %v1070 = vpack.c.b16 %v1012, %v1010
        %v1071 = vpack.c.b16 %v1013, %v1011
        %v1072 = vpack.c.b16 %v1016, %v1014
        %v1073 = vpack.c.b16 %v1017, %v1015
        %v1074 = vpack.c.b16 %v1020, %v1018
        %v1075 = vpack.c.b16 %v1021, %v1019
        %v1076 = vpack.c.b16 %v1024, %v1022
        %v1077 = vpack.c.b16 %v1025, %v1023
        %v1078 = vpack.c.b16 %v1028, %v1026
        %v1079 = vpack.c.b16 %v1029, %v1027
        %v1080 = vpack.c.b16 %v1032, %v1030
        %v1081 = vpack.c.b16 %v1033, %v1031
        %v1082 = vpack.c.b16 %v1036, %v1034
        %v1083 = vpack.c.b16 %v1037, %v1035
        %v1084 = vpack.c.b16 %v1040, %v1038
        %v1085 = vpack.c.b16 %v1041, %v1039
        %v1086 = vpack.c.b16 %v1044, %v1042
        %v1087 = vpack.c.b16 %v1045, %v1043
        %v1088 = vpack.c.b16 %v1048, %v1046
        %v1089 = vpack.c.b16 %v1049, %v1047
        %v1090 = vpack.c.b16 %v1052, %v1050
        %v1091 = vpack.c.b16 %v1053, %v1051
        %v1092 = vpack.c.b16 %v1056, %v1054
        %v1093 = vpack.c.b16 %v1057, %v1055
        %vm1130 = vcmask 261120
        %v1132 = vsel %vm1130, %v942, 0
        %v1135 = vsel %vm1130, %v945, 0
        %1137 = vmatprep.subr.bf16.mxu0 %v1073
        %1138 = vmatpush1.bf16.msra.mxu0 %v1072
        %1139 = vmatprep.subr.bf16.mxu0 %v1071
        %1140 = vmatpush1.bf16.msra.mxu0 %v1070
        %1141 = vmatprep.subr.bf16.mxu0 %v1069
        %1142 = vmatpush1.bf16.msra.mxu0 %v1068
        %1143 = vmatprep.subr.bf16.mxu0 %v1067
        %1144 = vmatpush1.bf16.msra.mxu0 %v1066
        %1145 = vmatprep.subr.bf16.mxu0 %v1065
        %1146 = vmatpush1.bf16.msra.mxu0 %v1064
        %1147 = vmatprep.subr.bf16.mxu0 %v1063
        %1148 = vmatpush1.bf16.msra.mxu0 %v1062
        %1149 = vmatprep.subr.bf16.mxu0 %v1061
        %1150 = vmatpush1.bf16.msra.mxu0 %v1060
        %1151 = vmatprep.subr.bf16.mxu0 %v1059
        %1152 = vmatpush1.bf16.msra.mxu0 %v1058
        %1153 = vmatprep.subr.bf16.mxu0 %v1089
        %1154 = vmatpush2.bf16.msra.mxu0 %v1088
        %1155 = vmatprep.subr.bf16.mxu0 %v1087
        %1156 = vmatpush2.bf16.msra.mxu0 %v1086
        %1157 = vmatprep.subr.bf16.mxu0 %v1085
        %1158 = vmatpush2.bf16.msra.mxu0 %v1084
        %1159 = vmatprep.subr.bf16.mxu0 %v1083
        %1160 = vmatpush2.bf16.msra.mxu0 %v1082
        %1161 = vmatprep.subr.bf16.mxu0 %v1081
        %1162 = vmatpush2.bf16.msra.mxu0 %v1080
        %1163 = vmatprep.subr.bf16.mxu0 %v1079
        %1164 = vmatpush2.bf16.msra.mxu0 %v1078
        %1165 = vmatprep.subr.bf16.mxu0 %v1077
        %1166 = vmatpush2.bf16.msra.mxu0 %v1076
        %1167 = vmatprep.subr.bf16.mxu0 %v1075
        %1168 = vmatpush2.bf16.msra.mxu0 %v1074
        %1169 = vmatprep.mubr.bf16.mxu0 %v941
        %1170 = vmatmul.mubr.bf16.gmra.mxu0 %v940
        %v1171 = vpop.f32.mrf.mxu0
        %v1172 = vadd.f32 %v903, %v1171
        %v1173 = vpop.f32.mrf.mxu0
        %v1174 = vadd.f32 %v903, %v1173
        %v1175 = vpop.f32.mrf.mxu0
        %v1176 = vadd.f32 %v908, %v1175
        %v1177 = vpop.f32.mrf.mxu0
        %v1178 = vadd.f32 %v908, %v1177
        %1179 = vmatprep.mubr.bf16.mxu0 %v944
        %1180 = vmatmul.mubr.bf16.gmra.mxu0 %v943
        %v1181 = vpop.f32.mrf.mxu0
        %v1182 = vadd.f32 %v913, %v1181
        %v1183 = vpop.f32.mrf.mxu0
        %v1184 = vadd.f32 %v913, %v1183
        %v1185 = vpop.f32.mrf.mxu0
        %v1186 = vadd.f32 %v918, %v1185
        %v1187 = vpop.f32.mrf.mxu0
        %v1188 = vadd.f32 %v918, %v1187
        %1189 = vdwg.mxu0
        %1190 = vmatprep.subr.bf16.mxu0 0
        %1191 = vmatpush1.bf16.msra.mxu0 0
        %1192 = vmatprep.subr.bf16.mxu0 0
        %1193 = vmatpush1.bf16.msra.mxu0 0
        %1194 = vmatprep.subr.bf16.mxu0 0
        %1195 = vmatpush1.bf16.msra.mxu0 0
        %1196 = vmatprep.subr.bf16.mxu0 0
        %1197 = vmatpush1.bf16.msra.mxu0 0
        %1198 = vmatprep.subr.bf16.mxu0 0
        %1199 = vmatpush1.bf16.msra.mxu0 0
        %1200 = vmatprep.subr.bf16.mxu0 0
        %1201 = vmatpush1.bf16.msra.mxu0 0
        %1202 = vmatprep.subr.bf16.mxu0 %v1093
        %1203 = vmatpush1.bf16.msra.mxu0 %v1092
        %1204 = vmatprep.subr.bf16.mxu0 %v1091
        %1205 = vmatpush1.bf16.msra.mxu0 %v1090
        %1206 = vmatprep.subr.bf16.mxu0 0
        %1207 = vmatpush2.bf16.msra.mxu0 0
        %1208 = vmatprep.subr.bf16.mxu0 0
        %1209 = vmatpush2.bf16.msra.mxu0 0
        %1210 = vmatprep.subr.bf16.mxu0 0
        %1211 = vmatpush2.bf16.msra.mxu0 0
        %1212 = vmatprep.subr.bf16.mxu0 0
        %1213 = vmatpush2.bf16.msra.mxu0 0
        %1214 = vmatprep.subr.bf16.mxu0 0
        %1215 = vmatpush2.bf16.msra.mxu0 0
        %1216 = vmatprep.subr.bf16.mxu0 0
        %1217 = vmatpush2.bf16.msra.mxu0 0
        %1218 = vmatprep.subr.bf16.mxu0 0
        %1219 = vmatpush2.bf16.msra.mxu0 0
        %1220 = vmatprep.subr.bf16.mxu0 0
        %1221 = vmatpush2.bf16.msra.mxu0 0
        %1222 = vmatprep.mubr.bf16.mxu0 0
        %1223 = vmatmul.mubr.bf16.gmra.mxu0 %v1132
        %v1224 = vpop.f32.mrf.mxu0
        %v1225 = vadd.f32 %v1172, %v1224
        %v1226 = vpop.f32.mrf.mxu0
        %v1227 = vadd.f32 %v1174, %v1226
        %v1228 = vpop.f32.mrf.mxu0
        %v1229 = vadd.f32 %v1176, %v1228
        %v1230 = vpop.f32.mrf.mxu0
        %v1231 = vadd.f32 %v1178, %v1230
        %1232 = vmatprep.mubr.bf16.mxu0 0
        %1233 = vmatmul.mubr.bf16.gmra.mxu0 %v1135
        %v1234 = vpop.f32.mrf.mxu0
        %v1235 = vadd.f32 %v1182, %v1234
        %v1236 = vpop.f32.mrf.mxu0
        %v1237 = vadd.f32 %v1184, %v1236
        %v1238 = vpop.f32.mrf.mxu0
        %v1239 = vadd.f32 %v1186, %v1238
        %v1240 = vpop.f32.mrf.mxu0
        %v1241 = vadd.f32 %v1188, %v1240
        %1242 = vdwg.mxu0
        %v1243 = vmax.f32 %v1225, 0.0
        %v1244 = vmax.f32 %v1227, 0.0
        %v1245 = vmax.f32 %v1229, 0.0
        %v1246 = vmax.f32 %v1231, 0.0
        %v1247 = vmax.f32 %v1235, 0.0
        %v1248 = vmax.f32 %v1237, 0.0
        %v1249 = vmax.f32 %v1239, 0.0
        %v1250 = vmax.f32 %v1241, 0.0
        %1251 = vst [vmem:[%s203] sm:$0xff] %v1243
        %1252 = vst [vmem:[%s203 + $0x8] sm:$0xff] %v1244
        %1253 = vst [vmem:[%s203 + $0x10] sm:$0xff] %v1245
        %1254 = vst [vmem:[%s203 + $0x18] sm:$0xff] %v1246
        %1255 = vst [vmem:[%s203 + $0x20] sm:$0xff] %v1247
        %1256 = vst [vmem:[%s203 + $0x28] sm:$0xff] %v1248
        %1257 = vst [vmem:[%s203 + $0x30] sm:$0xff] %v1249
        %1258 = vst [vmem:[%s203 + $0x38] sm:$0xff] %v1250
        %s1259 = sand.u32 %s97, 1
        %s1260 = scalar_lea.sflag [#allocation6], %s1259
        %s1261 = sand.u32 %s97, 1
        %s1262 = smul.addr %s1261, 64
        %s1263 = scalar_lea.vmem [#allocation9], %s1262
        // Predicated region
        $region41: #{tpu_custom_call.1} parent=31 // pred_check
          %p1264 = pneg %p107
        $region42: #{tpu_custom_call.1} parent=31 // pred_check_branch
          %1266 = sbr.rel (%p1264) target = $region44
        $region43: #{tpu_custom_call.1} parent=31 // pred_region
          %s1268 = ssub.s32 1024, 1024
          %1269 = vsyncadd %s1260, %s1268
          %s1270 = smul.addr %s21, 8
          %s1271 = smul.addr %s1270, 128
          %s1272 = scalar_lea.hbm %s3, %s1271
          %s1273 = sshll.u32 %s1263, 4
          %s1274 = int_to_ptr.vmem [resolvable:$true] %s1273
          %1279 = dma.vmem_to_hbm [thread:$0]  %s1274, 1024, %s1272, %s1260, 256, 256, 16
        $region44: #{tpu_custom_call.1} parent=31 // pred_fallthru
          _
      $region32: #{tpu_custom_call.1} parent=5 // pred_fallthru
        _
      %p1280 = scmp.le.s32.totalorder 2, %s16
      // Predicated region
      $region45: #{tpu_custom_call.1} parent=5 // pred_check
        %p1281 = pneg %p1280
      $region46: #{tpu_custom_call.1} parent=5 // pred_check_branch
        %1283 = sbr.rel (%p1281) target = $region48
      $region47: #{tpu_custom_call.1} parent=5 // pred_region
        %s1284 = ssub.s32 %s16, 2
        // Predicated region
        $region49: #{tpu_custom_call.1} parent=47 // pred_check
          %p1285 = pneg %p113
        $region50: #{tpu_custom_call.1} parent=47 // pred_check_branch
          %1287 = sbr.rel (%p1285) target = $region52
        $region51: #{tpu_custom_call.1} parent=47 // pred_region
          %s1288 = sand.u32 %s98, 1
          %s1289 = scalar_lea.sflag [#allocation6], %s1288
          %s1290 = sand.u32 %s98, 1
          %s1291 = smul.addr %s1290, 64
          %s1292 = scalar_lea.vmem [#allocation9], %s1291
          %1293 = dma.done %s1289, 1024
        $region52: #{tpu_custom_call.1} parent=47 // pred_fallthru
          _
      $region48: #{tpu_custom_call.1} parent=5 // pred_fallthru
        _
    $region6: #{tpu_custom_call.1} parent=1 // loop_footer
      %s20 = sadd.s32 1, %s16
    $region7: #{tpu_custom_call.1} parent=1 // loop_footer_branch
      %15 = sbr.rel target = $region3
    $region8: #{tpu_custom_call.1} parent=1 // loop_exit
      _
    %1294 = vsyncpa [#allocation5], 1
    %s1295 = scalar_lea.sflag [#allocation5], 1
    %1296 = vsyncpa %s1295, 1
    %1297 = vsyncpa [#allocation8], 1
    %1298 = vsyncpa [#allocation6], 1
    %s1299 = scalar_lea.sflag [#allocation6], 1
    %1300 = vsyncpa %s1299, 1

</llo_original>
